<compile_context>
chip_gen: v7x
topology: tpu7x:2x2x1
jax: 0.10.0
libtpu: 0.0.40
codegen_flags: <defaults>
</compile_context>

<pallas_src>
import functools
import math

import jax
import jax.numpy as jnp
from jax import lax
from jax.experimental import pallas as pl
from jax.experimental.pallas import tpu as pltpu


# --------------------------------------------------------------------------- #
# Kernel
# --------------------------------------------------------------------------- #
def _spec_aug_kernel(bounds_ref, fidx_ref, x_ref, o_ref, *,
                     time_stripes_num, freq_stripes_num, tf_tile):
    """One grid step == (row block i, flat tile j) of the (B*C, T*F) view.

    bounds: (SUB, 2*ts + 2*fs) int32.  Per row (row = b*C + c): columns are
            [tb0*F, te0*F, tb1*F, te1*F, ..., fb0, fe0, fb1, fe1, ...].
    fidx  : (1, tf_tile) int32 = (flat position) % F; identical for every tile
            because tf_tile is a multiple of F (or the whole T*F axis).
    x/o   : (SUB, tf_tile) block.
    """
    j = pl.program_id(1)

    # Global flat position (within T*F) of every lane of this tile.
    pos = j * tf_tile + lax.broadcasted_iota(jnp.int32, (1, tf_tile), 1)
    fidx = fidx_ref[...]                       # (1, tf_tile)
    bounds = bounds_ref[...]                   # (SUB, NB) int32

    drop = None

    # Time stripes: t in [tb, te)  <=>  flat pos in [tb*F, te*F) (pre-scaled).
    for s in range(time_stripes_num):
        lo = bounds[:, 2 * s:2 * s + 1]        # (SUB, 1)
        hi = bounds[:, 2 * s + 1:2 * s + 2]
        m = (pos >= lo) & (pos < hi)           # (SUB, tf_tile)
        drop = m if drop is None else (drop | m)

    # Freq stripes: f = pos % F in [fb, fe).
    off = 2 * time_stripes_num
    for s in range(freq_stripes_num):
        lo = bounds[:, off + 2 * s:off + 2 * s + 1]
        hi = bounds[:, off + 2 * s + 1:off + 2 * s + 2]
        m = (fidx >= lo) & (fidx < hi)
        drop = m if drop is None else (drop | m)

    x = x_ref[...]                             # (SUB, tf_tile)
    if drop is None:
        o_ref[...] = x
    else:
        o_ref[...] = jnp.where(drop, jnp.zeros_like(x), x)


# --------------------------------------------------------------------------- #
# Tiling / budget helpers
# --------------------------------------------------------------------------- #
def _vmem_capacity_bytes():
    try:
        info = pltpu.get_tpu_info()
    except Exception:
        return 128 << 20
    for name in ("vmem_capacity_bytes", "vmem_size_bytes", "vmem_bytes"):
        v = getattr(info, name, None)
        if isinstance(v, int) and v > 0:
            return v
    return 128 << 20


def _select_budgets():
    """(per-block x byte budget, vmem_limit_bytes), generation-aware."""
    vmem = _vmem_capacity_bytes()
    if vmem <= (64 << 20):
        # v7x-class: only 64 MiB VMEM but the fastest HBM -> largest blocks that fit.
        return 6 << 20, int(min(48 << 20, (vmem * 3) // 4))
    # v5e / v6e: 128 MiB physical VMEM; ~4 MiB blocks keep step overhead ~5%.
    return 4 << 20, 64 << 20


def _choose_tf_tile(sub_rows, freq_bins, tf_total, itemsize, budget_bytes, min_tiles):
    """Pick a lane-dense tile size along the flattened T*F axis."""
    step = freq_bins * (128 // math.gcd(freq_bins, 128))   # lcm(F, 128)
    if tf_total <= step:
        return tf_total, 1                                  # tiny input: one full tile
    # Largest lane-dense tile fitting the per-block byte budget.
    max_elems = max(step, (budget_bytes // max(1, sub_rows * itemsize)) // step * step)
    cap = tf_total
    if min_tiles > 1:
        # Force >= min_tiles grid steps (e.g. to feed both v7x TensorCores).
        cap = max(step, ((tf_total + min_tiles - 1) // min_tiles) // step * step)
    tf_tile = min(max_elems, cap)
    if tf_tile >= tf_total:
        return tf_total, 1
    return tf_tile, pl.cdiv(tf_total, tf_tile)


# --------------------------------------------------------------------------- #
# Wrapper
# --------------------------------------------------------------------------- #
def _apply_spec_aug(x, tb, te, fb, fe, time_stripes_num, freq_stripes_num):
    """Apply stripe dropping given explicit flat 1-D stripe bounds."""
    B, C, T, F = x.shape
    if time_stripes_num + freq_stripes_num == 0:
        return x

    R = B * C
    L = T * F
    itemsize = x.dtype.itemsize
    budget_bytes, vmem_limit = _select_budgets()

    sub = 8 if R >= 8 else R
    row_blocks = pl.cdiv(R, sub)
    min_tiles = 2 if row_blocks == 1 else 1
    tf_tile, n_tiles = _choose_tf_tile(sub, F, L, itemsize, budget_bytes, min_tiles)

    # Per-row (row = b*C + c) stripe bounds, int32.  Time bounds pre-scaled by F so
    # a time stripe [tb, te) is exactly the flat range [tb*F, te*F).
    tb2 = (tb.reshape(B, time_stripes_num) * F).astype(jnp.int32)
    te2 = (te.reshape(B, time_stripes_num) * F).astype(jnp.int32)
    fb2 = fb.reshape(B, freq_stripes_num).astype(jnp.int32)
    fe2 = fe.reshape(B, freq_stripes_num).astype(jnp.int32)
    nb = 2 * (time_stripes_num + freq_stripes_num)
    per_batch = jnp.concatenate(
        [jnp.stack([tb2, te2], axis=-1).reshape(B, 2 * time_stripes_num),
         jnp.stack([fb2, fe2], axis=-1).reshape(B, 2 * freq_stripes_num)],
        axis=-1)                                            # (B, nb)
    bounds = jnp.repeat(per_batch, C, axis=0)               # (R, nb)
    r_pad = row_blocks * sub
    if r_pad > R:                                           # pad rows: no-op bounds
        bounds = jnp.concatenate(
            [bounds, jnp.zeros((r_pad - R, nb), jnp.int32)], axis=0)

    # Per-lane freq index, identical for every tile (tf_tile % F == 0 or full axis).
    f_idx = (jnp.arange(tf_tile, dtype=jnp.int32) % F).reshape(1, tf_tile)

    xr = x.reshape(R, L)    # free, contiguous reshape -> lane-dense last dim

    kernel = functools.partial(
        _spec_aug_kernel,
        time_stripes_num=time_stripes_num,
        freq_stripes_num=freq_stripes_num,
        tf_tile=tf_tile)

    grid_spec = pltpu.PrefetchScalarGridSpec(
        num_scalar_prefetch=0,
        grid=(row_blocks, n_tiles),
        in_specs=[
            pl.BlockSpec((sub, nb), lambda i, j: (i, 0)),       # bounds (tiny, resident)
            pl.BlockSpec((1, tf_tile), lambda i, j: (0, 0)),    # f_idx (fetched once)
            pl.BlockSpec((sub, tf_tile), lambda i, j: (i, j)),  # x
        ],
        out_specs=pl.BlockSpec((sub, tf_tile), lambda i, j: (i, j)),
    )

    cost = pl.CostEstimate(
        flops=int(x.size) * (2 * (time_stripes_num + freq_stripes_num) + 1),
        transcendentals=0,
        bytes_accessed=2 * int(x.size) * itemsize)

    out = pl.pallas_call(
        kernel,
        out_shape=jax.ShapeDtypeStruct((R, L), x.dtype),
        grid_spec=grid_spec,
        cost_estimate=cost,
        compiler_params=pltpu.CompilerParams(
            dimension_semantics=("parallel", "parallel"),
            vmem_limit_bytes=int(vmem_limit)),
    )(bounds, f_idx, xr)

    return out.reshape(B, C, T, F)


# --------------------------------------------------------------------------- #
# Sampling + module-style entry point
# --------------------------------------------------------------------------- #
def _sample_stripes(key, batch_size, total_width, drop_width, stripes_num):
    """torch-style stripe sampling, flattened to 1-D (batch*stripes,) int32 arrays.

    Note: drop_width is clamped to total_width to keep both randint ranges valid
    (torch.randint would raise for drop_width > total_width).
    """
    k1, k2 = jax.random.split(key)
    dw = max(1, min(int(drop_width), int(total_width)))
    shape = (batch_size * stripes_num,)
    distance = jax.random.randint(k1, shape, minval=0, maxval=dw, dtype=jnp.int32)
    bgn = jax.random.randint(k2, shape, minval=0,
                             maxval=total_width - distance, dtype=jnp.int32)
    return bgn, bgn + distance


def spec_augmentation(x, key, *, time_drop_width, time_stripes_num,
                      freq_drop_width, freq_stripes_num, training=True):
    """Functional equivalent of torchlibrosa SpecAugmentation.forward.

    x: (batch, channels, time_steps, freq_bins). Eval mode is the identity.
    """
    if not training:
        return x
    B, C, T, F = x.shape
    k_time, k_freq = jax.random.split(key)
    tb, te = _sample_stripes(k_time, B, T, time_drop_width, time_stripes_num)
    fb, fe = _sample_stripes(k_freq, B, F, freq_drop_width, freq_stripes_num)
    return _apply_spec_aug(x, tb, te, fb, fe, time_stripes_num, freq_stripes_num)


# --------------------------------------------------------------------------- #
# Pure-JAX reference
# --------------------------------------------------------------------------- #
def _reference(x, tb, te, fb, fe, time_stripes_num, freq_stripes_num):
    """Pure-JAX reference for the same (flattened, unscaled) stripe bounds."""
    B, C, T, F = x.shape
    tb = tb.reshape(B, time_stripes_num)
    te = te.reshape(B, time_stripes_num)
    fb = fb.reshape(B, freq_stripes_num)
    fe = fe.reshape(B, freq_stripes_num)
    t_idx = jnp.arange(T)
    f_idx = jnp.arange(F)
    keep = jnp.ones((B, T, F), dtype=bool)
    for s in range(time_stripes_num):
        m = (t_idx[None, :] >= tb[:, s:s + 1]) & (t_idx[None, :] < te[:, s:s + 1])
        keep = keep & ~m[:, :, None]
    for s in range(freq_stripes_num):
        m = (f_idx[None, :] >= fb[:, s:s + 1]) & (f_idx[None, :] < fe[:, s:s + 1])
        keep = keep & ~m[:, None, :]
    return jnp.where(keep[:, None, :, :], x, jnp.zeros_like(x))


def _run_case(key, B, C, T, F, tdw, tsn, fdw, fsn):
    k_data, k_time, k_freq = jax.random.split(key, 3)
    x = jax.random.normal(k_data, (B, C, T, F), dtype=jnp.float32)
    tb, te = _sample_stripes(k_time, B, T, tdw, tsn)
    fb, fe = _sample_stripes(k_freq, B, F, fdw, fsn)
    out = jax.block_until_ready(_apply_spec_aug(x, tb, te, fb, fe, tsn, fsn))
    ref = _reference(x, tb, te, fb, fe, tsn, fsn)
    assert out.shape == x.shape and out.dtype == x.dtype
    assert bool(jnp.array_equal(out, ref)), f"mismatch vs reference (B={B},C={C},T={T},F={F})"
    return x


if __name__ == "__main__":
    key = jax.random.PRNGKey(0)
    k_case1, k_case2, k_aug = jax.random.split(key, 3)

    # Case 1: (batch, channels, time_steps, freq_bins) = (2, 4, 16, 16)
    #         -> 8 sublane-packed rows, flat axis split into 2 lane-dense tiles.
    x1 = _run_case(k_case1, B=2, C=4, T=16, F=16, tdw=4, tsn=2, fdw=3, fsn=2)

    # Case 2: mono C=1, non-power-of-two freq bins, partial trailing flat tile.
    _run_case(k_case2, B=3, C=1, T=20, F=80, tdw=5, tsn=2, fdw=10, fsn=2)

    # Module-style entry points (training samples internally, eval is identity).
    out_train = spec_augmentation(
        x1, k_aug,
        time_drop_width=4, time_stripes_num=2,
        freq_drop_width=3, freq_stripes_num=2,
        training=True)
    jax.block_until_ready(out_train)

    out_eval = spec_augmentation(
        x1, k_aug,
        time_drop_width=4, time_stripes_num=2,
        freq_drop_width=3, freq_stripes_num=2,
        training=False)
    assert bool(jnp.array_equal(out_eval, x1))

    print("KERNEL_OK")
</pallas_src>

<mosaic_0001>
module attributes {stable_mosaic.version = 11 : i64} {
  func.func @_spec_aug_kernel(%arg0: i32, %arg1: i32, %arg2: memref<8x8xi32, #tpu.memory_space<vmem>>, %arg3: memref<1x128xi32, #tpu.memory_space<vmem>>, %arg4: memref<8x128xf32, #tpu.memory_space<vmem>>, %arg5: memref<8x128xf32, #tpu.memory_space<vmem>>) attributes {dimension_semantics = [#tpu.dimension_semantics<parallel>, #tpu.dimension_semantics<parallel>], iteration_bounds = array<i64: 1, 2>, scalar_prefetch = 0 : i64, scratch_operands = 0 : i64, tpu.core_type = #tpu.core_type<tc>, window_params = [{transform_indices = @transform_0, window_bounds = array<i64: 8, 8>}, {pipeline_mode = #tpu.pipeline_mode<synchronous>, transform_indices = @transform_1, window_bounds = array<i64: 1, 128>}, {transform_indices = @transform_2, window_bounds = array<i64: 8, 128>}, {transform_indices = @transform_3, window_bounds = array<i64: 8, 128>}]} {
    %c128_i32 = arith.constant 128 : i32
    %0 = arith.muli %arg1, %c128_i32 : i32
    %1 = tpu.iota {dimensions = array<i32: 1>} : vector<1x128xi32>
    %2 = vector.broadcast %0 : i32 to vector<1x128xi32>
    %3 = arith.addi %2, %1 : vector<1x128xi32>
    %c0 = arith.constant 0 : index
    %c0_0 = arith.constant 0 : index
    %4 = vector.load %arg3[%c0, %c0_0] : memref<1x128xi32, #tpu.memory_space<vmem>>, vector<1x128xi32>
    %c0_1 = arith.constant 0 : index
    %c0_2 = arith.constant 0 : index
    %5 = vector.load %arg2[%c0_1, %c0_2] : memref<8x8xi32, #tpu.memory_space<vmem>>, vector<8x8xi32>
    %6 = vector.extract_strided_slice %5 {offsets = [0, 0], sizes = [8, 1], strides = [1, 1]} : vector<8x8xi32> to vector<8x1xi32>
    %7 = vector.extract_strided_slice %5 {offsets = [0, 1], sizes = [8, 1], strides = [1, 1]} : vector<8x8xi32> to vector<8x1xi32>
    %8 = vector.broadcast %3 : vector<1x128xi32> to vector<8x128xi32>
    %9 = vector.broadcast %6 : vector<8x1xi32> to vector<8x128xi32>
    %10 = arith.cmpi sge, %8, %9 : vector<8x128xi32>
    %11 = vector.broadcast %3 : vector<1x128xi32> to vector<8x128xi32>
    %12 = vector.broadcast %7 : vector<8x1xi32> to vector<8x128xi32>
    %13 = arith.cmpi slt, %11, %12 : vector<8x128xi32>
    %14 = arith.andi %10, %13 : vector<8x128xi1>
    %15 = vector.extract_strided_slice %5 {offsets = [0, 2], sizes = [8, 1], strides = [1, 1]} : vector<8x8xi32> to vector<8x1xi32>
    %16 = vector.extract_strided_slice %5 {offsets = [0, 3], sizes = [8, 1], strides = [1, 1]} : vector<8x8xi32> to vector<8x1xi32>
    %17 = vector.broadcast %3 : vector<1x128xi32> to vector<8x128xi32>
    %18 = vector.broadcast %15 : vector<8x1xi32> to vector<8x128xi32>
    %19 = arith.cmpi sge, %17, %18 : vector<8x128xi32>
    %20 = vector.broadcast %3 : vector<1x128xi32> to vector<8x128xi32>
    %21 = vector.broadcast %16 : vector<8x1xi32> to vector<8x128xi32>
    %22 = arith.cmpi slt, %20, %21 : vector<8x128xi32>
    %23 = arith.andi %19, %22 : vector<8x128xi1>
    %24 = arith.ori %14, %23 : vector<8x128xi1>
    %25 = vector.extract_strided_slice %5 {offsets = [0, 4], sizes = [8, 1], strides = [1, 1]} : vector<8x8xi32> to vector<8x1xi32>
    %26 = vector.extract_strided_slice %5 {offsets = [0, 5], sizes = [8, 1], strides = [1, 1]} : vector<8x8xi32> to vector<8x1xi32>
    %27 = vector.broadcast %4 : vector<1x128xi32> to vector<8x128xi32>
    %28 = vector.broadcast %25 : vector<8x1xi32> to vector<8x128xi32>
    %29 = arith.cmpi sge, %27, %28 : vector<8x128xi32>
    %30 = vector.broadcast %4 : vector<1x128xi32> to vector<8x128xi32>
    %31 = vector.broadcast %26 : vector<8x1xi32> to vector<8x128xi32>
    %32 = arith.cmpi slt, %30, %31 : vector<8x128xi32>
    %33 = arith.andi %29, %32 : vector<8x128xi1>
    %34 = arith.ori %24, %33 : vector<8x128xi1>
    %35 = vector.extract_strided_slice %5 {offsets = [0, 6], sizes = [8, 1], strides = [1, 1]} : vector<8x8xi32> to vector<8x1xi32>
    %36 = vector.extract_strided_slice %5 {offsets = [0, 7], sizes = [8, 1], strides = [1, 1]} : vector<8x8xi32> to vector<8x1xi32>
    %37 = vector.broadcast %4 : vector<1x128xi32> to vector<8x128xi32>
    %38 = vector.broadcast %35 : vector<8x1xi32> to vector<8x128xi32>
    %39 = arith.cmpi sge, %37, %38 : vector<8x128xi32>
    %40 = vector.broadcast %4 : vector<1x128xi32> to vector<8x128xi32>
    %41 = vector.broadcast %36 : vector<8x1xi32> to vector<8x128xi32>
    %42 = arith.cmpi slt, %40, %41 : vector<8x128xi32>
    %43 = arith.andi %39, %42 : vector<8x128xi1>
    %44 = arith.ori %34, %43 : vector<8x128xi1>
    %c0_3 = arith.constant 0 : index
    %c0_4 = arith.constant 0 : index
    %45 = vector.load %arg4[%c0_3, %c0_4] : memref<8x128xf32, #tpu.memory_space<vmem>>, vector<8x128xf32>
    %cst = arith.constant 0.000000e+00 : f32
    %46 = vector.broadcast %cst : f32 to vector<8x128xf32>
    %47 = arith.select %44, %46, %45 : vector<8x128xi1>, vector<8x128xf32>
    %c0_5 = arith.constant 0 : index
    %c0_6 = arith.constant 0 : index
    %48 = vector.load %arg5[%c0_5, %c0_6] : memref<8x128xf32, #tpu.memory_space<vmem>>, vector<8x128xf32>
    tpu.vector_store %arg5[%c0_5, %c0_6], %47 {strides = array<i32>} : memref<8x128xf32, #tpu.memory_space<vmem>>, vector<8x128xf32>,
    return
  }
  func.func @transform_0(%arg0: i32, %arg1: i32) -> (i32, i32) {
    %c0_i32 = arith.constant 0 : i32
    %c0_i32_0 = arith.constant 0 : i32
    return %arg0, %c0_i32 : i32, i32
  }
  func.func @transform_1(%arg0: i32, %arg1: i32) -> (i32, i32) {
    %c0_i32 = arith.constant 0 : i32
    %c0_i32_0 = arith.constant 0 : i32
    %c0_i32_1 = arith.constant 0 : i32
    return %c0_i32, %c0_i32_0 : i32, i32
  }
  func.func @transform_2(%arg0: i32, %arg1: i32) -> (i32, i32) {
    %c0_i32 = arith.constant 0 : i32
    return %arg0, %arg1 : i32, i32
  }
  func.func @transform_3(%arg0: i32, %arg1: i32) -> (i32, i32) {
    %c0_i32 = arith.constant 0 : i32
    return %arg0, %arg1 : i32, i32
  }
}

</mosaic_0001>

<llo_original>
// kernel: tpu_custom_call.1
$region0: #{tpu_custom_call.1}
  #allocation0 [shape = 'u32[]', space=smem, size = 0x4, offset = 0x4, fixed_abs, tag = 'smem constant byte address 0x4 - core index']
  #allocation1 [shape = 'u32[144,128]{1,0:T(1,128)}', space=vmem, size = 0x12000, scoped, tag = 'internal scratch']
  %s0 = inlined_call_operand.hbm [shape: s32[8,8], index: 0, kind: input, shape index: {}]
  %s1 = inlined_call_operand.hbm [shape: s32[1,128], index: 1, kind: input, shape index: {}]
  %s2 = inlined_call_operand.hbm [shape: f32[8,256], index: 2, kind: input, shape index: {}]
  %s3 = inlined_call_operand.hbm [shape: f32[8,256], index: 3, kind: output, shape index: {}]
  %s4 = sld [smem:[#allocation0]]
  $region57: #{tpu_custom_call.1} parent=0
    _
  %s6 = ssub.s32 1, %s4
  %s7 = scalar_select 0, %s6, %s4
  $region1: #{tpu_custom_call.1} parent=0
    #allocation2 [shape = 'u8[4096]{0}', space=vmem, size = 0x1000, scoped, tag = 'input window, operand 0, single buffered']
    #allocation3 [shape = 's32[2]{0}', space=sflag, size = 0x8, scoped, tag = 'scoped memory for tpu_custom_call.1']
    #allocation4 [shape = 's32[2]{0}', space=sflag, size = 0x8, scoped, tag = 'scoped memory for tpu_custom_call.1']
    #allocation5 [shape = 'u8[512]{0}', space=vmem, size = 0x400, scoped, tag = 'input window, operand 1, single buffered']
    #allocation6 [shape = 's32[1]{0}', space=sflag, size = 0x4, scoped, tag = 'scoped memory for tpu_custom_call.1']
    #allocation7 [shape = 'u8[8192]{0}', space=vmem, size = 0x2000, scoped, tag = 'input window, operand 2']
    #allocation8 [shape = 'u8[8192]{0}', space=vmem, size = 0x2000, scoped, tag = 'output window, operand 0']
    %8 = vsyncpa [#allocation3], 0
    %9 = vsyncpa [#allocation6], 0
    %10 = vsyncpa [#allocation4], 0
    %s11 = scalar_lea.sflag [#allocation4], 1
    %12 = vsyncpa %s11, 0
    loop: start=0, step=1, limit=4
    $region2: #{tpu_custom_call.1} parent=1 // loop_pre_header
      _
    $region3: #{tpu_custom_call.1} parent=1 // loop_header
      %s14 = sphi 0, %s18
      %p15 = scmp.ge.s32.totalorder %s14, 4
      %s21 = sphi 0, %s33
      %s22 = sphi 0, %s29
      %s23 = sphi 0, %s21
      %s24 = sphi 0, %s22
      %s25 = sphi 0, %s23
      %s26 = sphi 0, %s24
      %s36 = sphi 0, %s38
      %s39 = sphi 0, %s36
      %s40 = sphi 0, %s39
      %s56 = sphi 0, %s40
      %s60 = sphi 0, %s60
      %s62 = sphi 0, %s60
      %s63 = sphi 0, %s62
      %s77 = sphi 0, %s63
      %s85 = sphi 0, %s87
      %s88 = sphi 0, %s85
      %s89 = sphi 0, %s88
      %s105 = sphi 0, %s89
      %s113 = sphi 0, %s115
      %s116 = sphi 0, %s113
      %s117 = sphi 0, %s116
      %s133 = sphi 0, %s117
    $region4: #{tpu_custom_call.1} parent=1 // loop_header_branch
      %17 = sbr.rel (%p15) target = $region8
    $region5: #{tpu_custom_call.1} parent=1 // loop_body
      %s19 = ssub.s32 %s14, 1
      %s20 = ssub.s32 %s14, 2
      %s27 = sadd.s32 1, %s22
      %p28 = scmp.ge.s32.totalorder %s27, 2
      %s29 = scalar_select %p28, 0, %s27
      %s30 = sadd.s32 1, %s21
      %s31 = scalar_select %p28, %s30, %s21
      %p32 = scmp.ge.s32.totalorder %s31, 1
      %s33 = scalar_select %p32, 0, %s31
      %s34 = ssub.s32 %s21, %s33
      %p35 = scmp.eq.s32.totalorder %s34, 0
      %s37 = sadd.s32 %s36, 1
      %s38 = scalar_select %p35, %s36, %s37
      %p41 = pneg %p35
      %p42 = scmp.eq.s32.totalorder %s14, 1
      %p43 = por %p41, %p42
      %p44 = scmp.ne.s32.totalorder %s36, %s39
      %p45 = scmp.eq.s32.totalorder %s14, 0
      %p46 = por %p44, %p45
      %p47 = scmp.ne.s32.totalorder %s36, %s39
      %p48 = scmp.eq.s32.totalorder %s19, 1
      %p49 = por %p47, %p48
      %p50 = scmp.ne.s32.totalorder %s39, %s40
      %p51 = scmp.eq.s32.totalorder %s19, 0
      %p52 = por %p50, %p51
      %p53 = scmp.ne.s32.totalorder %s39, %s40
      %p54 = scmp.eq.s32.totalorder %s20, 1
      %p55 = por %p53, %p54
      %p57 = scmp.ne.s32.totalorder %s40, %s56
      %p58 = scmp.eq.s32.totalorder %s20, 0
      %p59 = por %p57, %p58
      %s61 = sadd.s32 %s60, 1
      %p64 = scmp.eq.s32.totalorder %s14, 1
      %p65 = scmp.ne.s32.totalorder %s60, %s62
      %p66 = scmp.eq.s32.totalorder %s14, 0
      %p67 = por %p65, %p66
      %p68 = scmp.ne.s32.totalorder %s60, %s62
      %p69 = scmp.eq.s32.totalorder %s19, 1
      %p70 = por %p68, %p69
      %p71 = scmp.ne.s32.totalorder %s62, %s63
      %p72 = scmp.eq.s32.totalorder %s19, 0
      %p73 = por %p71, %p72
      %p74 = scmp.ne.s32.totalorder %s62, %s63
      %p75 = scmp.eq.s32.totalorder %s20, 1
      %p76 = por %p74, %p75
      %p78 = scmp.ne.s32.totalorder %s63, %s77
      %p79 = scmp.eq.s32.totalorder %s20, 0
      %p80 = por %p78, %p79
      %s81 = ssub.s32 %s21, %s33
      %s82 = ssub.s32 %s22, %s29
      %s83 = sor.u32 %s81, %s82
      %p84 = scmp.eq.s32.totalorder %s83, 0
      %s86 = sadd.s32 %s85, 1
      %s87 = scalar_select %p84, %s85, %s86
      %p90 = pneg %p84
      %p91 = scmp.eq.s32.totalorder %s14, 1
      %p92 = por %p90, %p91
      %p93 = scmp.ne.s32.totalorder %s85, %s88
      %p94 = scmp.eq.s32.totalorder %s14, 0
      %p95 = por %p93, %p94
      %p96 = scmp.ne.s32.totalorder %s85, %s88
      %p97 = scmp.eq.s32.totalorder %s19, 1
      %p98 = por %p96, %p97
      %p99 = scmp.ne.s32.totalorder %s88, %s89
      %p100 = scmp.eq.s32.totalorder %s19, 0
      %p101 = por %p99, %p100
      %p102 = scmp.ne.s32.totalorder %s88, %s89
      %p103 = scmp.eq.s32.totalorder %s20, 1
      %p104 = por %p102, %p103
      %p106 = scmp.ne.s32.totalorder %s89, %s105
      %p107 = scmp.eq.s32.totalorder %s20, 0
      %p108 = por %p106, %p107
      %s109 = ssub.s32 %s21, %s33
      %s110 = ssub.s32 %s22, %s29
      %s111 = sor.u32 %s109, %s110
      %p112 = scmp.eq.s32.totalorder %s111, 0
      %s114 = sadd.s32 %s113, 1
      %s115 = scalar_select %p112, %s113, %s114
      %p118 = pneg %p112
      %p119 = scmp.eq.s32.totalorder %s14, 1
      %p120 = por %p118, %p119
      %p121 = scmp.ne.s32.totalorder %s113, %s116
      %p122 = scmp.eq.s32.totalorder %s14, 0
      %p123 = por %p121, %p122
      %p124 = scmp.ne.s32.totalorder %s113, %s116
      %p125 = scmp.eq.s32.totalorder %s19, 1
      %p126 = por %p124, %p125
      %p127 = scmp.ne.s32.totalorder %s116, %s117
      %p128 = scmp.eq.s32.totalorder %s19, 0
      %p129 = por %p127, %p128
      %p130 = scmp.ne.s32.totalorder %s116, %s117
      %p131 = scmp.eq.s32.totalorder %s20, 1
      %p132 = por %p130, %p131
      %p134 = scmp.ne.s32.totalorder %s117, %s133
      %p135 = scmp.eq.s32.totalorder %s20, 0
      %p136 = por %p134, %p135
      %p137 = scmp.le.s32.totalorder 1, %s14
      %p138 = scmp.lt.s32.totalorder %s14, 3
      %p139 = pnand %p137, %p138
      %p140 = pneg %p139
      // Predicated region
      $region9: #{tpu_custom_call.1} parent=5 // pred_check
        _
      $region10: #{tpu_custom_call.1} parent=5 // pred_check_branch
        %142 = sbr.rel (%p139) target = $region12
      $region11: #{tpu_custom_call.1} parent=5 // pred_region
        %s143 = ssub.s32 %s14, 1
        // Predicated region
        $region13: #{tpu_custom_call.1} parent=11 // pred_check
          %p144 = pneg %p52
        $region14: #{tpu_custom_call.1} parent=11 // pred_check_branch
          %146 = sbr.rel (%p144) target = $region16
        $region15: #{tpu_custom_call.1} parent=11 // pred_region
          %s148 = ssub.s32 128, 128
          %149 = vsyncadd [#allocation3], %s148
          %s150 = smul.addr %s23, 128
          %s151 = scalar_lea.hbm %s0, %s150
          %s153 = sshll.u32 [#allocation2], 4
          %s154 = int_to_ptr.vmem [resolvable:$true] %s153
          %156 = dma.hbm_to_vmem [thread:$0]  %s151, 128, %s154, [#allocation3]
        $region16: #{tpu_custom_call.1} parent=11 // pred_fallthru
          _
        // Predicated region
        $region17: #{tpu_custom_call.1} parent=11 // pred_check
          %p157 = pneg %p73
        $region18: #{tpu_custom_call.1} parent=11 // pred_check_branch
          %159 = sbr.rel (%p157) target = $region20
        $region19: #{tpu_custom_call.1} parent=11 // pred_region
          %s161 = ssub.s32 16, 16
          %162 = vsyncadd [#allocation6], %s161
          %s164 = sshll.u32 [#allocation5], 4
          %s165 = int_to_ptr.vmem [resolvable:$true] %s164
          %167 = dma.hbm_to_vmem [thread:$0]  %s1, 16, %s165, [#allocation6]
        $region20: #{tpu_custom_call.1} parent=11 // pred_fallthru
          _
      $region12: #{tpu_custom_call.1} parent=5 // pred_fallthru
        _
      %p168 = scmp.lt.s32.totalorder %s14, 2
      // Predicated region
      $region21: #{tpu_custom_call.1} parent=5 // pred_check
        %p169 = pneg %p168
      $region22: #{tpu_custom_call.1} parent=5 // pred_check_branch
        %171 = sbr.rel (%p169) target = $region24
      $region23: #{tpu_custom_call.1} parent=5 // pred_region
        // Predicated region
        $region25: #{tpu_custom_call.1} parent=23 // pred_check
          %p172 = pneg %p95
        $region26: #{tpu_custom_call.1} parent=23 // pred_check_branch
          %174 = sbr.rel (%p172) target = $region28
        $region27: #{tpu_custom_call.1} parent=23 // pred_region
          %s175 = sand.u32 %s14, 1
          %s176 = scalar_lea.sflag [#allocation3], %s175
          %s177 = sand.u32 %s85, 1
          %s178 = smul.addr %s177, 8
          %s179 = scalar_lea.vmem [#allocation7], %s178
          %s181 = ssub.s32 128, 128
          %182 = vsyncadd %s176, %s181
          %s183 = smul.addr %s21, 2
          %s184 = sadd.s32 %s22, %s183
          %s185 = smul.addr %s184, 128
          %s186 = scalar_lea.hbm %s2, %s185
          %s188 = sshll.u32 %s179, 4
          %s189 = int_to_ptr.vmem [resolvable:$true] %s188
          %191 = dma.hbm_to_vmem [thread:$0]  %s186, 128, %s189, %s176
        $region28: #{tpu_custom_call.1} parent=23 // pred_fallthru
          _
      $region24: #{tpu_custom_call.1} parent=5 // pred_fallthru
        _
      %p192 = scmp.le.s32.totalorder 1, %s14
      %p193 = scmp.lt.s32.totalorder %s14, 3
      %p194 = pnand %p192, %p193
      %p195 = pneg %p194
      // Predicated region
      $region29: #{tpu_custom_call.1} parent=5 // pred_check
        _
      $region30: #{tpu_custom_call.1} parent=5 // pred_check_branch
        %197 = sbr.rel (%p194) target = $region32
      $region31: #{tpu_custom_call.1} parent=5 // pred_region
        %s198 = ssub.s32 %s14, 1
        // Predicated region
        $region33: #{tpu_custom_call.1} parent=31 // pred_check
          %p199 = pneg %p52
        $region34: #{tpu_custom_call.1} parent=31 // pred_check_branch
          %201 = sbr.rel (%p199) target = $region36
        $region35: #{tpu_custom_call.1} parent=31 // pred_region
          %202 = dma.done [#allocation3], 128
        $region36: #{tpu_custom_call.1} parent=31 // pred_fallthru
          _
        // Predicated region
        $region37: #{tpu_custom_call.1} parent=31 // pred_check
          %p203 = pneg %p73
        $region38: #{tpu_custom_call.1} parent=31 // pred_check_branch
          %205 = sbr.rel (%p203) target = $region40
        $region39: #{tpu_custom_call.1} parent=31 // pred_region
          %206 = dma.done [#allocation6], 16
        $region40: #{tpu_custom_call.1} parent=31 // pred_fallthru
          _
        %s207 = sand.u32 %s19, 1
        %s208 = scalar_lea.sflag [#allocation3], %s207
        %s209 = sand.u32 %s88, 1
        %s210 = smul.addr %s209, 8
        %s211 = scalar_lea.vmem [#allocation7], %s210
        // Predicated region
        $region41: #{tpu_custom_call.1} parent=31 // pred_check
          %p212 = pneg %p101
        $region42: #{tpu_custom_call.1} parent=31 // pred_check_branch
          %214 = sbr.rel (%p212) target = $region44
        $region43: #{tpu_custom_call.1} parent=31 // pred_region
          %215 = dma.done %s208, 128
        $region44: #{tpu_custom_call.1} parent=31 // pred_fallthru
          _
        %p216 = pneg %p52
        %p217 = pneg %p49
        %p218 = pneg %p73
        %p219 = pneg %p70
        %s220 = sand.u32 %s19, 1
        %s221 = scalar_lea.sflag [#allocation3], %s220
        %s222 = sand.u32 %s88, 1
        %s223 = smul.addr %s222, 8
        %s224 = scalar_lea.vmem [#allocation7], %s223
        %p225 = pneg %p101
        %p226 = pneg %p98
        %p227 = pneg %p129
        %p228 = pneg %p126
        %s229 = sand.u32 %s116, 1
        %s230 = scalar_lea.sflag [#allocation4], %s229
        %s231 = sand.u32 %s116, 1
        %s232 = smul.addr %s231, 8
        %s233 = scalar_lea.vmem [#allocation8], %s232
        %s234 = smul.u32 %s24, 128
        %v235 = vlaneseq
        %v236 = vand.u32 %v235, 127
        %v237 = vstv %s234
        %v238 = vadd.s32 %v237, %v236
        %v239 = vld [vmem:[#allocation5] sm:$0x1]
        %v240 = vld [vmem:[#allocation2] sm:$0xff]
        %241 = vset.pattern.permute.xlu0 0
        %242 = vperm.xlu0 %241, %v240
        %v243 = vpop.permute.xlu0 %242
        %vm244 = vcmp.ge.s32.totalorder %v238, %v243
        %245 = vset.pattern.permute.xlu0 1
        %246 = vperm.xlu0 %245, %v240
        %v247 = vpop.permute.xlu0 %246
        %vm248 = vcmp.lt.s32.totalorder %v238, %v247
        %vm249 = vmand %vm244, %vm248
        %250 = vset.pattern.permute.xlu0 2
        %251 = vperm.xlu0 %250, %v240
        %v252 = vpop.permute.xlu0 %251
        %vm253 = vcmp.ge.s32.totalorder %v238, %v252
        %254 = vset.pattern.permute.xlu0 3
        %255 = vperm.xlu0 %254, %v240
        %v256 = vpop.permute.xlu0 %255
        %vm257 = vcmp.lt.s32.totalorder %v238, %v256
        %vm258 = vmand %vm253, %vm257
        %vm259 = vmor %vm249, %vm258
        %v260 = vlaneseq
        %v261 = vshrl.u32 %v260, 7
        %v262 = vsub.s32 0, %v261
        %v263 = vrot.slane %v239, %v262
        %264 = vset.pattern.permute.xlu0 4
        %265 = vperm.xlu0 %264, %v240
        %v266 = vpop.permute.xlu0 %265
        %vm267 = vcmp.ge.s32.totalorder %v263, %v266
        %268 = vset.pattern.permute.xlu0 5
        %269 = vperm.xlu0 %268, %v240
        %v270 = vpop.permute.xlu0 %269
        %vm271 = vcmp.lt.s32.totalorder %v263, %v270
        %vm272 = vmand %vm267, %vm271
        %vm273 = vmor %vm259, %vm272
        %274 = vset.pattern.permute.xlu0 6
        %275 = vperm.xlu0 %274, %v240
        %v276 = vpop.permute.xlu0 %275
        %vm277 = vcmp.ge.s32.totalorder %v263, %v276
        %278 = vset.pattern.permute.xlu0 7
        %279 = vperm.xlu0 %278, %v240
        %v280 = vpop.permute.xlu0 %279
        %vm281 = vcmp.lt.s32.totalorder %v263, %v280
        %vm282 = vmand %vm277, %vm281
        %vm283 = vmor %vm273, %vm282
        %v284 = vld [vmem:[%s211] sm:$0xff]
        %v285 = vsel %vm283, 0.0, %v284
        %286 = vst [vmem:[%s233] sm:$0xff] %v285
        %s287 = sand.u32 %s116, 1
        %s288 = scalar_lea.sflag [#allocation4], %s287
        %s289 = sand.u32 %s116, 1
        %s290 = smul.addr %s289, 8
        %s291 = scalar_lea.vmem [#allocation8], %s290
        // Predicated region
        $region45: #{tpu_custom_call.1} parent=31 // pred_check
          %p292 = pneg %p126
        $region46: #{tpu_custom_call.1} parent=31 // pred_check_branch
          %294 = sbr.rel (%p292) target = $region48
        $region47: #{tpu_custom_call.1} parent=31 // pred_region
          %s296 = ssub.s32 128, 128
          %297 = vsyncadd %s288, %s296
          %s298 = smul.addr %s23, 2
          %s299 = sadd.s32 %s24, %s298
          %s300 = smul.addr %s299, 128
          %s301 = scalar_lea.hbm %s3, %s300
          %s303 = sshll.u32 %s291, 4
          %s304 = int_to_ptr.vmem [resolvable:$true] %s303
          %306 = dma.vmem_to_hbm [thread:$0]  %s304, 128, %s301, %s288
        $region48: #{tpu_custom_call.1} parent=31 // pred_fallthru
          _
      $region32: #{tpu_custom_call.1} parent=5 // pred_fallthru
        _
      %p307 = scmp.le.s32.totalorder 2, %s14
      // Predicated region
      $region49: #{tpu_custom_call.1} parent=5 // pred_check
        %p308 = pneg %p307
      $region50: #{tpu_custom_call.1} parent=5 // pred_check_branch
        %310 = sbr.rel (%p308) target = $region52
      $region51: #{tpu_custom_call.1} parent=5 // pred_region
        %s311 = ssub.s32 %s14, 2
        // Predicated region
        $region53: #{tpu_custom_call.1} parent=51 // pred_check
          %p312 = pneg %p132
        $region54: #{tpu_custom_call.1} parent=51 // pred_check_branch
          %314 = sbr.rel (%p312) target = $region56
        $region55: #{tpu_custom_call.1} parent=51 // pred_region
          %s315 = sand.u32 %s117, 1
          %s316 = scalar_lea.sflag [#allocation4], %s315
          %s317 = sand.u32 %s117, 1
          %s318 = smul.addr %s317, 8
          %s319 = scalar_lea.vmem [#allocation8], %s318
          %320 = dma.done %s316, 128
        $region56: #{tpu_custom_call.1} parent=51 // pred_fallthru
          _
      $region52: #{tpu_custom_call.1} parent=5 // pred_fallthru
        _
    $region6: #{tpu_custom_call.1} parent=1 // loop_footer
      %s18 = sadd.s32 1, %s14
    $region7: #{tpu_custom_call.1} parent=1 // loop_footer_branch
      %13 = sbr.rel target = $region3
    $region8: #{tpu_custom_call.1} parent=1 // loop_exit
      _
    %321 = vsyncpa [#allocation3], 1
    %s322 = scalar_lea.sflag [#allocation3], 1
    %323 = vsyncpa %s322, 1
    %324 = vsyncpa [#allocation6], 1
    %325 = vsyncpa [#allocation4], 1
    %s326 = scalar_lea.sflag [#allocation4], 1
    %327 = vsyncpa %s326, 1

</llo_original>
